<compile_context>
chip_gen: v5e
topology: v5e:2x2
jax: 0.10.0
libtpu: 0.0.40
codegen_flags: <defaults>
</compile_context>

<pallas_src>
import math

import jax
import jax.numpy as jnp
from jax.experimental import pallas as pl
from jax.experimental.pallas import tpu as pltpu


def _round_up(x, m):
    return ((x + m - 1) // m) * m


def _sublane(dtype):
    # Second-to-last-dim tile multiple: 8 (4-byte), 16 (2-byte), 32 (1-byte).
    return max(8, 32 // jnp.dtype(dtype).itemsize)


def _vmem_capacity_bytes():
    try:
        return int(pltpu.get_tpu_info().vmem_capacity_bytes)
    except Exception:
        return 64 << 20  # conservative fallback (v7x per-TensorCore VMEM)


def _pick_block_rows(total_rows, per_row_bytes, resident_bytes, sublane,
                     max_rows=4096):
    """Largest row tile whose pipelined working set fits the VMEM budget."""
    cap = _vmem_capacity_bytes()
    budget = cap // 2                       # headroom for compiler scratch etc.
    avail = max(budget - resident_bytes, 1 << 20)
    r = int(avail // max(per_row_bytes, 1))
    r = max(min(r, max_rows), sublane)      # amortization saturates ~1-4k rows
    if r >= total_rows:
        return total_rows                   # single full-extent block (always legal)
    if r >= 128:
        return (r // 128) * 128             # lane-dense output stores
    return max((r // sublane) * sublane, sublane)


def _vmem_limit_bytes(needed_bytes):
    cap = _vmem_capacity_bytes()
    return max(32 << 20, min(needed_bytes + (4 << 20), int(cap * 9 // 10)))


def _layer(h, w, b):
    # MXU matmul with f32 accumulation; bias + relu fused on the VPU in f32.
    h = h.astype(w.dtype)
    y = jnp.dot(h, w, preferred_element_type=jnp.float32)
    return jnp.maximum(y + b.astype(jnp.float32), 0.0)


def _make_fused_kernel(num_layers, packed):
    def kernel(xi_ref, xj_ref, *refs):
        if packed:
            *prefs, sel_ref, o_ref = refs
        else:
            *prefs, o_ref = refs
        hi = xi_ref[...]
        hj = xj_ref[...]
        for l in range(num_layers):
            w = prefs[2 * l][...]
            b = prefs[2 * l + 1][...]
            hi = _layer(hi, w, b)
            hj = _layer(hj, w, b)
        prod = hi * hj                                        # f32, (rows, width)
        if packed:
            # Segmented per-logical-row reduction on the otherwise-idle MXU,
            # oriented to yield a lane-dense (G, rows) output block.
            acc = jax.lax.dot_general(
                sel_ref[...], prod,
                dimension_numbers=(((1,), (1,)), ((), ())),
                preferred_element_type=jnp.float32)           # (G, rows)
        else:
            # Reduce + transpose in one matmul -> lane-dense (1, rows) block
            # (avoids an (rows, 1) column output with 1-of-128-lane stores).
            ones = jnp.ones((1, prod.shape[1]), jnp.float32)
            acc = jax.lax.dot_general(
                ones, prod,
                dimension_numbers=(((1,), (1,)), ((), ())),
                preferred_element_type=jnp.float32)           # (1, rows)
        o_ref[...] = acc.astype(o_ref.dtype)
    return kernel


def mlp_dot_forward(x_i, x_j, weights, biases):
    """Fused forward: relu(linear) stack on both branches + row-wise dot."""
    assert x_i.shape == x_j.shape, "x_i and x_j must have identical shapes"
    lead = x_i.shape[:-1]
    K0 = x_i.shape[-1]
    N = math.prod(lead) if lead else 1
    num_layers = len(weights)
    dtype = x_i.dtype
    itemsize = jnp.dtype(dtype).itemsize
    sub = _sublane(dtype)

    widths = [w.shape[1] for w in weights]
    hidden = widths[-1]
    packable = (K0 == hidden and all(m == hidden for m in widths)
                and hidden <= 128 and 128 % hidden == 0)

    xi2 = x_i.reshape(N, K0)
    xj2 = x_j.reshape(N, K0)

    sum_km = sum(w.shape[0] * w.shape[1] for w in weights)
    flops = N * (4 * sum_km + 2 * hidden)

    if packable:
        D = hidden
        G = 128 // D
        n_g = _round_up(N, G)
        if n_g != N:  # tiny (< G rows) alignment pad needed for the packed reshape
            xi2 = jnp.pad(xi2, ((0, n_g - N), (0, 0)))
            xj2 = jnp.pad(xj2, ((0, n_g - N), (0, 0)))
        wrows = n_g // G
        xiw = xi2.reshape(wrows, 128)           # contiguous reshape: layout-free
        xjw = xj2.reshape(wrows, 128)

        eye = jnp.eye(G, dtype=weights[0].dtype)
        params = []
        for w, b in zip(weights, biases):
            params.append(jnp.kron(eye, w))                    # (128, 128) block-diag
            params.append(jnp.tile(b, G).reshape(1, 128))      # (1, 128)
        # sel[g, l] = 1 iff lane l belongs to logical-row group g (l // D == g).
        sel = (jnp.arange(G)[:, None]
               == (jnp.arange(128)[None, :] // D)).astype(jnp.float32)  # (G, 128)

        resident = sum(int(p.size) * jnp.dtype(p.dtype).itemsize for p in params)
        resident += int(sel.size) * 4
        # 2 inputs x 2 pipeline buffers + ~4 live f32 activation temporaries.
        per_row = 4 * 128 * itemsize + 4 * 128 * 4
        rw = _pick_block_rows(wrows, per_row, resident, sub)
        num_blocks = pl.cdiv(wrows, rw)
        needed = rw * per_row + resident + 2 * G * rw * itemsize

        in_specs = [pl.BlockSpec((rw, 128), lambda i: (i, 0)),
                    pl.BlockSpec((rw, 128), lambda i: (i, 0))]
        for p in params:
            in_specs.append(pl.BlockSpec(p.shape, lambda i: (0, 0)))   # resident
        in_specs.append(pl.BlockSpec(sel.shape, lambda i: (0, 0)))     # resident

        out = pl.pallas_call(
            _make_fused_kernel(num_layers, packed=True),
            out_shape=jax.ShapeDtypeStruct((G, wrows), dtype),
            grid_spec=pltpu.PrefetchScalarGridSpec(
                num_scalar_prefetch=0,
                grid=(num_blocks,),
                in_specs=in_specs,
                out_specs=pl.BlockSpec((G, rw), lambda i: (0, i)),
            ),
            compiler_params=pltpu.CompilerParams(
                dimension_semantics=("parallel",),
                vmem_limit_bytes=_vmem_limit_bytes(needed),
            ),
            cost_estimate=pl.CostEstimate(
                flops=flops, transcendentals=0,
                bytes_accessed=(2 * n_g * D + n_g) * itemsize + resident,
            ),
        )(xiw, xjw, *params, sel)
        # (G, W): logical row n = w*G + g  ->  transpose + flatten (touches N*4 B).
        flat = out.T.reshape(-1)[:N]
        return flat.reshape(lead)

    # ---- General (unpacked) path: feature dims kept as-is. --------------------
    # TODO(synk): for large K/M where weights cannot stay VMEM-resident
    # (e.g. hidden >= 2048 f32 on v7x), tile the weight over M ("parallel")
    # with a K-reduction grid axis ("arbitrary") and an f32 VMEM accumulator
    # instead of this fully-resident fused path.
    params = []
    for w, b in zip(weights, biases):
        params.append(w)
        params.append(b.reshape(1, -1))
    resident = sum(int(p.size) * jnp.dtype(p.dtype).itemsize for p in params)
    width_pad = max(_round_up(K0, 128), max(_round_up(m, 128) for m in widths))
    per_row = 4 * _round_up(K0, 128) * itemsize + 4 * width_pad * 4
    r = _pick_block_rows(N, per_row, resident, sub)
    num_blocks = pl.cdiv(N, r)
    needed = r * per_row + resident + 2 * r * itemsize

    in_specs = [pl.BlockSpec((r, K0), lambda i: (i, 0)),
                pl.BlockSpec((r, K0), lambda i: (i, 0))]
    for p in params:
        in_specs.append(pl.BlockSpec(p.shape, lambda i: (0, 0)))       # resident

    out = pl.pallas_call(
        _make_fused_kernel(num_layers, packed=False),
        out_shape=jax.ShapeDtypeStruct((1, N), dtype),
        grid_spec=pltpu.PrefetchScalarGridSpec(
            num_scalar_prefetch=0,
            grid=(num_blocks,),
            in_specs=in_specs,
            out_specs=pl.BlockSpec((1, r), lambda i: (0, i)),
        ),
        compiler_params=pltpu.CompilerParams(
            dimension_semantics=("parallel",),
            vmem_limit_bytes=_vmem_limit_bytes(needed),
        ),
        cost_estimate=pl.CostEstimate(
            flops=flops, transcendentals=0,
            bytes_accessed=(2 * N * K0 + N) * itemsize + resident,
        ),
    )(xi2, xj2, *params)
    return out[0].reshape(lead)


class MLPDotPredictorPallas:
    """Pallas TPU implementation of MLPDotPredictor.forward (inference mode)."""

    def __init__(self, in_channels, hidden_channels, num_layers, dropout, *,
                 key, dtype=jnp.float32):
        self.dropout = dropout
        self.weights = []
        self.biases = []
        dims = [in_channels] + [hidden_channels] * num_layers
        for li in range(num_layers):
            key, wk, bk = jax.random.split(key, 3)
            bound = 1.0 / math.sqrt(dims[li])
            self.weights.append(
                jax.random.uniform(wk, (dims[li], dims[li + 1]), dtype, -bound, bound))
            self.biases.append(
                jax.random.uniform(bk, (dims[li + 1],), dtype, -bound, bound))

    def __call__(self, x_i, x_j):
        # TODO(synk): training-mode dropout (stochastic masking via pltpu PRNG)
        # is not implemented; this is the eval-mode forward (dropout == identity).
        return mlp_dot_forward(x_i, x_j, self.weights, self.biases)


if __name__ == "__main__":
    key = jax.random.PRNGKey(0)
    kmod, ki, kj = jax.random.split(key, 3)

    in_channels, hidden_channels, num_layers, dropout = 32, 32, 2, 0.0
    model = MLPDotPredictorPallas(in_channels, hidden_channels, num_layers,
                                  dropout, key=kmod)

    # Small shapes consistent with the forward: (batch=2, seq=8, hidden=32)
    x_i = jax.random.normal(ki, (2, 8, in_channels), dtype=jnp.float32)
    x_j = jax.random.normal(kj, (2, 8, in_channels), dtype=jnp.float32)

    out = jax.block_until_ready(model(x_i, x_j))

    # Pure-JAX reference (eval-mode forward).
    ri, rj = x_i, x_j
    for w, b in zip(model.weights, model.biases):
        ri = jax.nn.relu(ri @ w + b)
        rj = jax.nn.relu(rj @ w + b)
    ref = jnp.sum(ri * rj, axis=-1)

    assert out.shape == ref.shape, (out.shape, ref.shape)
    assert jnp.allclose(out, ref, atol=1e-3, rtol=1e-3), "mismatch vs reference"

    print("KERNEL_OK")
</pallas_src>

<mosaic_0001>
module attributes {stable_mosaic.version = 11 : i64} {
  func.func @kernel(%arg0: i32, %arg1: memref<4x128xf32, #tpu.memory_space<vmem>>, %arg2: memref<4x128xf32, #tpu.memory_space<vmem>>, %arg3: memref<128x128xf32, #tpu.memory_space<vmem>>, %arg4: memref<1x128xf32, #tpu.memory_space<vmem>>, %arg5: memref<128x128xf32, #tpu.memory_space<vmem>>, %arg6: memref<1x128xf32, #tpu.memory_space<vmem>>, %arg7: memref<4x128xf32, #tpu.memory_space<vmem>>, %arg8: memref<4x4xf32, #tpu.memory_space<vmem>>) attributes {dimension_semantics = [#tpu.dimension_semantics<parallel>], iteration_bounds = array<i64: 1>, scalar_prefetch = 0 : i64, scratch_operands = 0 : i64, tpu.core_type = #tpu.core_type<tc>, window_params = [{transform_indices = @transform_0, window_bounds = array<i64: 4, 128>}, {transform_indices = @transform_1, window_bounds = array<i64: 4, 128>}, {pipeline_mode = #tpu.pipeline_mode<synchronous>, transform_indices = @transform_2, window_bounds = array<i64: 128, 128>}, {pipeline_mode = #tpu.pipeline_mode<synchronous>, transform_indices = @transform_3, window_bounds = array<i64: 1, 128>}, {pipeline_mode = #tpu.pipeline_mode<synchronous>, transform_indices = @transform_4, window_bounds = array<i64: 128, 128>}, {pipeline_mode = #tpu.pipeline_mode<synchronous>, transform_indices = @transform_5, window_bounds = array<i64: 1, 128>}, {pipeline_mode = #tpu.pipeline_mode<synchronous>, transform_indices = @transform_6, window_bounds = array<i64: 4, 128>}, {transform_indices = @transform_7, window_bounds = array<i64: 4, 4>}]} {
    %c0 = arith.constant 0 : index
    %c0_0 = arith.constant 0 : index
    %0 = vector.load %arg1[%c0, %c0_0] : memref<4x128xf32, #tpu.memory_space<vmem>>, vector<4x128xf32>
    %c0_1 = arith.constant 0 : index
    %c0_2 = arith.constant 0 : index
    %1 = vector.load %arg2[%c0_1, %c0_2] : memref<4x128xf32, #tpu.memory_space<vmem>>, vector<4x128xf32>
    %c0_3 = arith.constant 0 : index
    %c0_4 = arith.constant 0 : index
    %2 = vector.load %arg3[%c0_3, %c0_4] : memref<128x128xf32, #tpu.memory_space<vmem>>, vector<128x128xf32>
    %c0_5 = arith.constant 0 : index
    %c0_6 = arith.constant 0 : index
    %3 = vector.load %arg4[%c0_5, %c0_6] : memref<1x128xf32, #tpu.memory_space<vmem>>, vector<1x128xf32>
    %cst = arith.constant dense<0.000000e+00> : vector<4x128xf32>
    %4 = tpu.matmul %0, %2, %cst {dimension_numbers = #tpu.dot_dimension_numbers<[1], [0], [0], [1], [0, 0, 1, 1], [], []>} : vector<4x128xf32>, vector<128x128xf32>, vector<4x128xf32> -> vector<4x128xf32>
    %5 = vector.broadcast %3 : vector<1x128xf32> to vector<4x128xf32>
    %6 = arith.addf %4, %5 : vector<4x128xf32>
    %cst_7 = arith.constant 0.000000e+00 : f32
    %7 = vector.broadcast %cst_7 : f32 to vector<4x128xf32>
    %8 = arith.maximumf %6, %7 : vector<4x128xf32>
    %cst_8 = arith.constant dense<0.000000e+00> : vector<4x128xf32>
    %9 = tpu.matmul %1, %2, %cst_8 {dimension_numbers = #tpu.dot_dimension_numbers<[1], [0], [0], [1], [0, 0, 1, 1], [], []>} : vector<4x128xf32>, vector<128x128xf32>, vector<4x128xf32> -> vector<4x128xf32>
    %10 = vector.broadcast %3 : vector<1x128xf32> to vector<4x128xf32>
    %11 = arith.addf %9, %10 : vector<4x128xf32>
    %cst_9 = arith.constant 0.000000e+00 : f32
    %12 = vector.broadcast %cst_9 : f32 to vector<4x128xf32>
    %13 = arith.maximumf %11, %12 : vector<4x128xf32>
    %c0_10 = arith.constant 0 : index
    %c0_11 = arith.constant 0 : index
    %14 = vector.load %arg5[%c0_10, %c0_11] : memref<128x128xf32, #tpu.memory_space<vmem>>, vector<128x128xf32>
    %c0_12 = arith.constant 0 : index
    %c0_13 = arith.constant 0 : index
    %15 = vector.load %arg6[%c0_12, %c0_13] : memref<1x128xf32, #tpu.memory_space<vmem>>, vector<1x128xf32>
    %cst_14 = arith.constant dense<0.000000e+00> : vector<4x128xf32>
    %16 = tpu.matmul %8, %14, %cst_14 {dimension_numbers = #tpu.dot_dimension_numbers<[1], [0], [0], [1], [0, 0, 1, 1], [], []>} : vector<4x128xf32>, vector<128x128xf32>, vector<4x128xf32> -> vector<4x128xf32>
    %17 = vector.broadcast %15 : vector<1x128xf32> to vector<4x128xf32>
    %18 = arith.addf %16, %17 : vector<4x128xf32>
    %cst_15 = arith.constant 0.000000e+00 : f32
    %19 = vector.broadcast %cst_15 : f32 to vector<4x128xf32>
    %20 = arith.maximumf %18, %19 : vector<4x128xf32>
    %cst_16 = arith.constant dense<0.000000e+00> : vector<4x128xf32>
    %21 = tpu.matmul %13, %14, %cst_16 {dimension_numbers = #tpu.dot_dimension_numbers<[1], [0], [0], [1], [0, 0, 1, 1], [], []>} : vector<4x128xf32>, vector<128x128xf32>, vector<4x128xf32> -> vector<4x128xf32>
    %22 = vector.broadcast %15 : vector<1x128xf32> to vector<4x128xf32>
    %23 = arith.addf %21, %22 : vector<4x128xf32>
    %cst_17 = arith.constant 0.000000e+00 : f32
    %24 = vector.broadcast %cst_17 : f32 to vector<4x128xf32>
    %25 = arith.maximumf %23, %24 : vector<4x128xf32>
    %26 = arith.mulf %20, %25 : vector<4x128xf32>
    %c0_18 = arith.constant 0 : index
    %c0_19 = arith.constant 0 : index
    %27 = vector.load %arg7[%c0_18, %c0_19] : memref<4x128xf32, #tpu.memory_space<vmem>>, vector<4x128xf32>
    %cst_20 = arith.constant dense<0.000000e+00> : vector<4x4xf32>
    %28 = tpu.matmul %27, %26, %cst_20 {dimension_numbers = #tpu.dot_dimension_numbers<[1], [1], [0], [0], [0, 0, 1, 0], [], []>} : vector<4x128xf32>, vector<4x128xf32>, vector<4x4xf32> -> vector<4x4xf32>
    %c0_21 = arith.constant 0 : index
    %c0_22 = arith.constant 0 : index
    %29 = vector.load %arg8[%c0_21, %c0_22] : memref<4x4xf32, #tpu.memory_space<vmem>>, vector<4x4xf32>
    tpu.vector_store %arg8[%c0_21, %c0_22], %28 {strides = array<i32>} : memref<4x4xf32, #tpu.memory_space<vmem>>, vector<4x4xf32>,
    return
  }
  func.func @transform_0(%arg0: i32) -> (i32, i32) {
    %c0_i32 = arith.constant 0 : i32
    %c0_i32_0 = arith.constant 0 : i32
    return %arg0, %c0_i32 : i32, i32
  }
  func.func @transform_1(%arg0: i32) -> (i32, i32) {
    %c0_i32 = arith.constant 0 : i32
    %c0_i32_0 = arith.constant 0 : i32
    return %arg0, %c0_i32 : i32, i32
  }
  func.func @transform_2(%arg0: i32) -> (i32, i32) {
    %c0_i32 = arith.constant 0 : i32
    %c0_i32_0 = arith.constant 0 : i32
    %c0_i32_1 = arith.constant 0 : i32
    return %c0_i32, %c0_i32_0 : i32, i32
  }
  func.func @transform_3(%arg0: i32) -> (i32, i32) {
    %c0_i32 = arith.constant 0 : i32
    %c0_i32_0 = arith.constant 0 : i32
    %c0_i32_1 = arith.constant 0 : i32
    return %c0_i32, %c0_i32_0 : i32, i32
  }
  func.func @transform_4(%arg0: i32) -> (i32, i32) {
    %c0_i32 = arith.constant 0 : i32
    %c0_i32_0 = arith.constant 0 : i32
    %c0_i32_1 = arith.constant 0 : i32
    return %c0_i32, %c0_i32_0 : i32, i32
  }
  func.func @transform_5(%arg0: i32) -> (i32, i32) {
    %c0_i32 = arith.constant 0 : i32
    %c0_i32_0 = arith.constant 0 : i32
    %c0_i32_1 = arith.constant 0 : i32
    return %c0_i32, %c0_i32_0 : i32, i32
  }
  func.func @transform_6(%arg0: i32) -> (i32, i32) {
    %c0_i32 = arith.constant 0 : i32
    %c0_i32_0 = arith.constant 0 : i32
    %c0_i32_1 = arith.constant 0 : i32
    return %c0_i32, %c0_i32_0 : i32, i32
  }
  func.func @transform_7(%arg0: i32) -> (i32, i32) {
    %c0_i32 = arith.constant 0 : i32
    %c0_i32_0 = arith.constant 0 : i32
    return %c0_i32, %arg0 : i32, i32
  }
}

</mosaic_0001>

<llo_original>
// kernel: tpu_custom_call.1
$region0: #{tpu_custom_call.1}
  #allocation0 [shape = 'u32[]', space=smem, size = 0x4, offset = 0x4, fixed_abs, tag = 'smem constant byte address 0x4 - core index']
  #allocation1 [shape = 'u32[72,128]{1,0:T(1,128)}', space=vmem, size = 0x9000, scoped, tag = 'internal scratch']
  %s0 = inlined_call_operand.hbm [shape: f32[4,128], index: 0, kind: input, shape index: {}]
  %s1 = inlined_call_operand.hbm [shape: f32[4,128], index: 1, kind: input, shape index: {}]
  %s2 = inlined_call_operand.hbm [shape: f32[128,128], index: 2, kind: input, shape index: {}]
  %s3 = inlined_call_operand.vmem [shape: f32[1,128], index: 3, kind: input, shape index: {}]
  %s4 = inlined_call_operand.hbm [shape: f32[128,128], index: 4, kind: input, shape index: {}]
  %s5 = inlined_call_operand.hbm [shape: f32[1,128], index: 5, kind: input, shape index: {}]
  %s6 = inlined_call_operand.vmem [shape: f32[4,128], index: 6, kind: input, shape index: {}]
  %s7 = inlined_call_operand.hbm [shape: f32[4,4], index: 7, kind: output, shape index: {}]
  %s8 = sld [smem:[#allocation0]]
  $region58: #{tpu_custom_call.1} parent=0
    _
  %s10 = ssub.s32 1, %s8
  %s11 = scalar_select 0, %s10, %s8
  $region1: #{tpu_custom_call.1} parent=0
    #allocation2 [shape = 'u8[2048]{0}', space=vmem, size = 0x800, scoped, tag = 'input window, operand 0, single buffered']
    #allocation3 [shape = 's32[1]{0}', space=sflag, size = 0x4, scoped, tag = 'scoped memory for tpu_custom_call.1']
    #allocation4 [shape = 's32[1]{0}', space=sflag, size = 0x4, scoped, tag = 'scoped memory for tpu_custom_call.1']
    #allocation5 [shape = 'u8[2048]{0}', space=vmem, size = 0x800, scoped, tag = 'input window, operand 1, single buffered']
    #allocation6 [shape = 's32[1]{0}', space=sflag, size = 0x4, scoped, tag = 'scoped memory for tpu_custom_call.1']
    #allocation7 [shape = 'u8[65536]{0}', space=vmem, size = 0x10000, scoped, tag = 'input window, operand 2, single buffered']
    #allocation8 [shape = 'u8[65536]{0}', space=vmem, size = 0x10000, scoped, tag = 'input window, operand 4, single buffered']
    #allocation9 [shape = 's32[1]{0}', space=sflag, size = 0x4, scoped, tag = 'scoped memory for tpu_custom_call.1']
    #allocation10 [shape = 'u8[512]{0}', space=vmem, size = 0x400, scoped, tag = 'input window, operand 5, single buffered']
    #allocation11 [shape = 'u8[2048]{0}', space=vmem, size = 0x800, scoped, tag = 'output window, operand 0, single buffered']
    %12 = vsyncpa [#allocation3], 0
    %13 = vsyncpa [#allocation6], 0
    %14 = vsyncpa [#allocation9], 0
    %15 = vsyncpa [#allocation4], 0
    // Predicated region
    $region2: #{tpu_custom_call.1} parent=1 // pred_check
      _
    $region3: #{tpu_custom_call.1} parent=1 // pred_check_branch
      %17 = sbr.rel (0) target = $region5
    $region4: #{tpu_custom_call.1} parent=1 // pred_region
      %19 = vsyncadd [#allocation3], 0
      %s21 = sshll.u32 %s0, 4
      %s22 = int_to_ptr.hbm [resolvable:$true] %s21
      %s23 = sshll.u32 [#allocation2], 4
      %s24 = int_to_ptr.vmem [resolvable:$true] %s23
      %26 = dma.hbm_to_vmem [thread:$0]  %s22, 64, %s24, [#allocation3]
    $region5: #{tpu_custom_call.1} parent=1 // pred_fallthru
      _
    // Predicated region
    $region6: #{tpu_custom_call.1} parent=1 // pred_check
      _
    $region7: #{tpu_custom_call.1} parent=1 // pred_check_branch
      %28 = sbr.rel (0) target = $region9
    $region8: #{tpu_custom_call.1} parent=1 // pred_region
      %30 = vsyncadd [#allocation6], 0
      %s32 = sshll.u32 %s1, 4
      %s33 = int_to_ptr.hbm [resolvable:$true] %s32
      %s34 = sshll.u32 [#allocation5], 4
      %s35 = int_to_ptr.vmem [resolvable:$true] %s34
      %37 = dma.hbm_to_vmem [thread:$0]  %s33, 64, %s35, [#allocation6]
    $region9: #{tpu_custom_call.1} parent=1 // pred_fallthru
      _
    // Predicated region
    $region10: #{tpu_custom_call.1} parent=1 // pred_check
      _
    $region11: #{tpu_custom_call.1} parent=1 // pred_check_branch
      %39 = sbr.rel (0) target = $region13
    $region12: #{tpu_custom_call.1} parent=1 // pred_region
      %41 = vsyncadd [#allocation6], 0
      %s42 = sshll.u32 %s2, 4
      %s43 = int_to_ptr.hbm [resolvable:$true] %s42
      %s44 = sshll.u32 [#allocation7], 4
      %s45 = int_to_ptr.vmem [resolvable:$true] %s44
      %50 = dma.hbm_to_vmem [thread:$0]  %s43, 2048, %s45, [#allocation6], 128, 128, 8
    $region13: #{tpu_custom_call.1} parent=1 // pred_fallthru
      _
    // Predicated region
    $region14: #{tpu_custom_call.1} parent=1 // pred_check
      _
    $region15: #{tpu_custom_call.1} parent=1 // pred_check_branch
      %52 = sbr.rel (0) target = $region17
    $region16: #{tpu_custom_call.1} parent=1 // pred_region
      _
    $region17: #{tpu_custom_call.1} parent=1 // pred_fallthru
      _
    // Predicated region
    $region18: #{tpu_custom_call.1} parent=1 // pred_check
      _
    $region19: #{tpu_custom_call.1} parent=1 // pred_check_branch
      %54 = sbr.rel (0) target = $region21
    $region20: #{tpu_custom_call.1} parent=1 // pred_region
      %56 = vsyncadd [#allocation9], 0
      %s57 = sshll.u32 %s4, 4
      %s58 = int_to_ptr.hbm [resolvable:$true] %s57
      %s59 = sshll.u32 [#allocation8], 4
      %s60 = int_to_ptr.vmem [resolvable:$true] %s59
      %65 = dma.hbm_to_vmem [thread:$0]  %s58, 2048, %s60, [#allocation9], 128, 128, 8
    $region21: #{tpu_custom_call.1} parent=1 // pred_fallthru
      _
    // Predicated region
    $region22: #{tpu_custom_call.1} parent=1 // pred_check
      _
    $region23: #{tpu_custom_call.1} parent=1 // pred_check_branch
      %67 = sbr.rel (0) target = $region25
    $region24: #{tpu_custom_call.1} parent=1 // pred_region
      %69 = vsyncadd [#allocation9], 0
      %s71 = sshll.u32 %s5, 4
      %s72 = int_to_ptr.hbm [resolvable:$true] %s71
      %s73 = sshll.u32 [#allocation10], 4
      %s74 = int_to_ptr.vmem [resolvable:$true] %s73
      %76 = dma.hbm_to_vmem [thread:$0]  %s72, 16, %s74, [#allocation9]
    $region25: #{tpu_custom_call.1} parent=1 // pred_fallthru
      _
    // Predicated region
    $region26: #{tpu_custom_call.1} parent=1 // pred_check
      _
    $region27: #{tpu_custom_call.1} parent=1 // pred_check_branch
      %78 = sbr.rel (0) target = $region29
    $region28: #{tpu_custom_call.1} parent=1 // pred_region
      _
    $region29: #{tpu_custom_call.1} parent=1 // pred_fallthru
      _
    // Predicated region
    $region30: #{tpu_custom_call.1} parent=1 // pred_check
      _
    $region31: #{tpu_custom_call.1} parent=1 // pred_check_branch
      %80 = sbr.rel (0) target = $region33
    $region32: #{tpu_custom_call.1} parent=1 // pred_region
      %82 = dma.done [#allocation3], 64
    $region33: #{tpu_custom_call.1} parent=1 // pred_fallthru
      _
    // Predicated region
    $region34: #{tpu_custom_call.1} parent=1 // pred_check
      _
    $region35: #{tpu_custom_call.1} parent=1 // pred_check_branch
      %84 = sbr.rel (0) target = $region37
    $region36: #{tpu_custom_call.1} parent=1 // pred_region
      %86 = dma.done [#allocation6], 64
    $region37: #{tpu_custom_call.1} parent=1 // pred_fallthru
      _
    // Predicated region
    $region38: #{tpu_custom_call.1} parent=1 // pred_check
      _
    $region39: #{tpu_custom_call.1} parent=1 // pred_check_branch
      %88 = sbr.rel (0) target = $region41
    $region40: #{tpu_custom_call.1} parent=1 // pred_region
      %90 = dma.done [#allocation6], 2048
    $region41: #{tpu_custom_call.1} parent=1 // pred_fallthru
      _
    // Predicated region
    $region42: #{tpu_custom_call.1} parent=1 // pred_check
      _
    $region43: #{tpu_custom_call.1} parent=1 // pred_check_branch
      %92 = sbr.rel (0) target = $region45
    $region44: #{tpu_custom_call.1} parent=1 // pred_region
      %94 = dma.done [#allocation9], 2048
    $region45: #{tpu_custom_call.1} parent=1 // pred_fallthru
      _
    // Predicated region
    $region46: #{tpu_custom_call.1} parent=1 // pred_check
      _
    $region47: #{tpu_custom_call.1} parent=1 // pred_check_branch
      %96 = sbr.rel (0) target = $region49
    $region48: #{tpu_custom_call.1} parent=1 // pred_region
      %98 = dma.done [#allocation9], 16
    $region49: #{tpu_custom_call.1} parent=1 // pred_fallthru
      _
    %v99 = vld [vmem:[#allocation2] sm:$0xf]
    %v100 = vld [vmem:[#allocation5] sm:$0xf]
    %v101 = vld [vmem:[#allocation7] sm:$0xff]
    %v102 = vld [vmem:[#allocation7 + $0x8] sm:$0xff]
    %v103 = vld [vmem:[#allocation7 + $0x10] sm:$0xff]
    %v104 = vld [vmem:[#allocation7 + $0x18] sm:$0xff]
    %v105 = vld [vmem:[#allocation7 + $0x20] sm:$0xff]
    %v106 = vld [vmem:[#allocation7 + $0x28] sm:$0xff]
    %v107 = vld [vmem:[#allocation7 + $0x30] sm:$0xff]
    %v108 = vld [vmem:[#allocation7 + $0x38] sm:$0xff]
    %v109 = vld [vmem:[#allocation7 + $0x40] sm:$0xff]
    %v110 = vld [vmem:[#allocation7 + $0x48] sm:$0xff]
    %v111 = vld [vmem:[#allocation7 + $0x50] sm:$0xff]
    %v112 = vld [vmem:[#allocation7 + $0x58] sm:$0xff]
    %v113 = vld [vmem:[#allocation7 + $0x60] sm:$0xff]
    %v114 = vld [vmem:[#allocation7 + $0x68] sm:$0xff]
    %v115 = vld [vmem:[#allocation7 + $0x70] sm:$0xff]
    %v116 = vld [vmem:[#allocation7 + $0x78] sm:$0xff]
    %v117 = vld [vmem:[%s3] sm:$0x1]
    %v119 = vperm.slane %v117, 0
    %121 = vmatpush.msra.mxu0 %v116
    %122 = vmatpush.msra.mxu0 %v115
    %123 = vmatpush.msra.mxu0 %v114
    %124 = vmatpush.msra.mxu0 %v113
    %125 = vmatpush.msra.mxu0 %v112
    %126 = vmatpush.msra.mxu0 %v111
    %127 = vmatpush.msra.mxu0 %v110
    %128 = vmatpush.msra.mxu0 %v109
    %129 = vmatpush.msra.mxu0 %v108
    %130 = vmatpush.msra.mxu0 %v107
    %131 = vmatpush.msra.mxu0 %v106
    %132 = vmatpush.msra.mxu0 %v105
    %133 = vmatpush.msra.mxu0 %v104
    %134 = vmatpush.msra.mxu0 %v103
    %135 = vmatpush.msra.mxu0 %v102
    %136 = vmatpush.msra.mxu0 %v101
    %137 = vmatmul.f32.gmra.mxu0 %v99
    %v138 = vpop.f32.mrf.mxu0
    %v139 = vadd.f32 %v119, %v138
    %140 = vdwg.mxu0
    %v141 = vmax.f32 %v139, 0.0
    %142 = vmatpush.msra.mxu0 %v116
    %143 = vmatpush.msra.mxu0 %v115
    %144 = vmatpush.msra.mxu0 %v114
    %145 = vmatpush.msra.mxu0 %v113
    %146 = vmatpush.msra.mxu0 %v112
    %147 = vmatpush.msra.mxu0 %v111
    %148 = vmatpush.msra.mxu0 %v110
    %149 = vmatpush.msra.mxu0 %v109
    %150 = vmatpush.msra.mxu0 %v108
    %151 = vmatpush.msra.mxu0 %v107
    %152 = vmatpush.msra.mxu0 %v106
    %153 = vmatpush.msra.mxu0 %v105
    %154 = vmatpush.msra.mxu0 %v104
    %155 = vmatpush.msra.mxu0 %v103
    %156 = vmatpush.msra.mxu0 %v102
    %157 = vmatpush.msra.mxu0 %v101
    %158 = vmatmul.f32.gmra.mxu0 %v100
    %v159 = vpop.f32.mrf.mxu0
    %v160 = vadd.f32 %v119, %v159
    %161 = vdwg.mxu0
    %v162 = vmax.f32 %v160, 0.0
    %v163 = vld [vmem:[#allocation8] sm:$0xff]
    %v164 = vld [vmem:[#allocation8 + $0x8] sm:$0xff]
    %v165 = vld [vmem:[#allocation8 + $0x10] sm:$0xff]
    %v166 = vld [vmem:[#allocation8 + $0x18] sm:$0xff]
    %v167 = vld [vmem:[#allocation8 + $0x20] sm:$0xff]
    %v168 = vld [vmem:[#allocation8 + $0x28] sm:$0xff]
    %v169 = vld [vmem:[#allocation8 + $0x30] sm:$0xff]
    %v170 = vld [vmem:[#allocation8 + $0x38] sm:$0xff]
    %v171 = vld [vmem:[#allocation8 + $0x40] sm:$0xff]
    %v172 = vld [vmem:[#allocation8 + $0x48] sm:$0xff]
    %v173 = vld [vmem:[#allocation8 + $0x50] sm:$0xff]
    %v174 = vld [vmem:[#allocation8 + $0x58] sm:$0xff]
    %v175 = vld [vmem:[#allocation8 + $0x60] sm:$0xff]
    %v176 = vld [vmem:[#allocation8 + $0x68] sm:$0xff]
    %v177 = vld [vmem:[#allocation8 + $0x70] sm:$0xff]
    %v178 = vld [vmem:[#allocation8 + $0x78] sm:$0xff]
    %v179 = vld [vmem:[#allocation10] sm:$0x1]
    %v181 = vperm.slane %v179, 0
    %183 = vmatpush.msra.mxu0 %v178
    %184 = vmatpush.msra.mxu0 %v177
    %185 = vmatpush.msra.mxu0 %v176
    %186 = vmatpush.msra.mxu0 %v175
    %187 = vmatpush.msra.mxu0 %v174
    %188 = vmatpush.msra.mxu0 %v173
    %189 = vmatpush.msra.mxu0 %v172
    %190 = vmatpush.msra.mxu0 %v171
    %191 = vmatpush.msra.mxu0 %v170
    %192 = vmatpush.msra.mxu0 %v169
    %193 = vmatpush.msra.mxu0 %v168
    %194 = vmatpush.msra.mxu0 %v167
    %195 = vmatpush.msra.mxu0 %v166
    %196 = vmatpush.msra.mxu0 %v165
    %197 = vmatpush.msra.mxu0 %v164
    %198 = vmatpush.msra.mxu0 %v163
    %199 = vmatmul.f32.gmra.mxu0 %v141
    %v200 = vpop.f32.mrf.mxu0
    %v201 = vadd.f32 %v181, %v200
    %202 = vdwg.mxu0
    %v203 = vmax.f32 %v201, 0.0
    %204 = vmatpush.msra.mxu0 %v178
    %205 = vmatpush.msra.mxu0 %v177
    %206 = vmatpush.msra.mxu0 %v176
    %207 = vmatpush.msra.mxu0 %v175
    %208 = vmatpush.msra.mxu0 %v174
    %209 = vmatpush.msra.mxu0 %v173
    %210 = vmatpush.msra.mxu0 %v172
    %211 = vmatpush.msra.mxu0 %v171
    %212 = vmatpush.msra.mxu0 %v170
    %213 = vmatpush.msra.mxu0 %v169
    %214 = vmatpush.msra.mxu0 %v168
    %215 = vmatpush.msra.mxu0 %v167
    %216 = vmatpush.msra.mxu0 %v166
    %217 = vmatpush.msra.mxu0 %v165
    %218 = vmatpush.msra.mxu0 %v164
    %219 = vmatpush.msra.mxu0 %v163
    %220 = vmatmul.f32.gmra.mxu0 %v162
    %v221 = vpop.f32.mrf.mxu0
    %v222 = vadd.f32 %v181, %v221
    %223 = vdwg.mxu0
    %v224 = vmax.f32 %v222, 0.0
    %v225 = vmul.f32 %v203, %v224
    %v226 = vld [vmem:[%s6] sm:$0xf]
    %227 = vmatpush.xpose.msra.mxu0 0.0
    %228 = vmatpush.xpose.msra.mxu0 0.0
    %229 = vmatpush.xpose.msra.mxu0 0.0
    %230 = vmatpush.xpose.msra.mxu0 0.0
    %231 = vmatpush.xpose.msra.mxu0 0.0
    %232 = vmatpush.xpose.msra.mxu0 0.0
    %233 = vmatpush.xpose.msra.mxu0 0.0
    %234 = vmatpush.xpose.msra.mxu0 0.0
    %235 = vmatpush.xpose.msra.mxu0 0.0
    %236 = vmatpush.xpose.msra.mxu0 0.0
    %237 = vmatpush.xpose.msra.mxu0 0.0
    %238 = vmatpush.xpose.msra.mxu0 0.0
    %239 = vmatpush.xpose.msra.mxu0 0.0
    %240 = vmatpush.xpose.msra.mxu0 0.0
    %241 = vmatpush.xpose.msra.mxu0 0.0
    %242 = vmatpush.xpose.msra.mxu0 %v225
    %243 = vmatmul.f32.gmra.mxu0 %v226
    %v244 = vpop.f32.mrf.mxu0
    %v245 = vadd.f32 0.0, %v244
    %246 = vdwg.mxu0
    %vm247 = vcmask 27648
    %248 = vst.msk [vmem:[#allocation11] sm:$0xf] %vm247, %v245
    // Predicated region
    $region50: #{tpu_custom_call.1} parent=1 // pred_check
      _
    $region51: #{tpu_custom_call.1} parent=1 // pred_check_branch
      %250 = sbr.rel (0) target = $region53
    $region52: #{tpu_custom_call.1} parent=1 // pred_region
      %252 = vsyncadd [#allocation4], 0
      %s254 = sshll.u32 [#allocation11], 4
      %s255 = int_to_ptr.vmem [resolvable:$true] %s254
      %s256 = sshll.u32 %s7, 4
      %s257 = int_to_ptr.hbm [resolvable:$true] %s256
      %259 = dma.vmem_to_hbm [thread:$0]  %s255, 64, %s257, [#allocation4]
    $region53: #{tpu_custom_call.1} parent=1 // pred_fallthru
      _
    // Predicated region
    $region54: #{tpu_custom_call.1} parent=1 // pred_check
      _
    $region55: #{tpu_custom_call.1} parent=1 // pred_check_branch
      %261 = sbr.rel (0) target = $region57
    $region56: #{tpu_custom_call.1} parent=1 // pred_region
      %263 = dma.done [#allocation4], 64
    $region57: #{tpu_custom_call.1} parent=1 // pred_fallthru
      _
    %264 = vsyncpa [#allocation3], 1
    %265 = vsyncpa [#allocation6], 1
    %266 = vsyncpa [#allocation9], 1
    %267 = vsyncpa [#allocation4], 1

</llo_original>
